<compile_context>
chip_gen: v7x
topology: tpu7x:2x2x1
jax: 0.10.0
libtpu: 0.0.40
codegen_flags: <defaults>
</compile_context>

<pallas_src>
import functools

import jax
import jax.numpy as jnp
from jax import lax
from jax.experimental import pallas as pl
from jax.experimental.pallas import tpu as pltpu

_TM_CAP = 1024   # pairwise row-tile cap (multiple of 8)
_TN_CAP = 2048   # pairwise col-tile cap (multiple of 128, lane-dense output)


def _round_up(n, m):
    return ((n + m - 1) // m) * m


def _cdiv(a, b):
    return -(-a // b)


def _vmem_limit_bytes():
    """Generation-aware scoped-VMEM budget with ~25% headroom."""
    try:
        cap = int(pltpu.get_tpu_info().vmem_capacity_bytes)
    except Exception:
        cap = 64 * 1024 * 1024  # conservative (v7x-sized) fallback
    return int(max(32 * 1024 * 1024, min(int(cap * 0.75), 96 * 1024 * 1024)))


def _softplus(x):
    # Stable softplus: max(x, 0) + log1p(exp(-|x|))
    return jnp.maximum(x, 0.0) + jnp.log1p(jnp.exp(-jnp.abs(x)))


# ---------------------------------------------------------------------------
# Phase 1: phi_scaled(u) = s * (MLP(u) [+ skip]) and cn = -0.5*||phi_scaled||^2
# (the scale s is pre-folded into the last-layer weights in the wrapper)
# ---------------------------------------------------------------------------
def _phi_kernel(add_skip, u_ref, w1_ref, b1_ref, w2_ref, b2_ref, w3_ref, b3_ref, *rest):
    if add_skip:
        wsk_ref, phi_ref, cn_ref = rest
    else:
        phi_ref, cn_ref = rest
        wsk_ref = None

    u = u_ref[...]
    h = _softplus(jnp.dot(u, w1_ref[...], preferred_element_type=jnp.float32) + b1_ref[...])
    h = _softplus(jnp.dot(h, w2_ref[...], preferred_element_type=jnp.float32) + b2_ref[...])
    out = jnp.dot(h, w3_ref[...], preferred_element_type=jnp.float32) + b3_ref[...]
    if wsk_ref is not None:
        out = out + jnp.dot(u, wsk_ref[...], preferred_element_type=jnp.float32)
    phi_ref[...] = out
    # coeff-scaled squared row norm (tile already resident -> nearly free reduce).
    cn_ref[...] = -0.5 * jnp.sum(out * out, axis=1, keepdims=True)


def _phi_forward(u_pad, params, add_skip, row_tile, vmem_limit):
    """u_pad: (R, D), R multiple of row_tile. Returns (phi_scaled (R,H), cn (R,1))."""
    R, D = u_pad.shape
    H = params[1].shape[1]  # b1 is (1, H)

    in_specs = [pl.BlockSpec((row_tile, D), lambda i: (i, 0))]
    for p in params:
        nd = p.ndim
        # Weights / biases: full-array block, constant index -> resident in VMEM.
        in_specs.append(pl.BlockSpec(p.shape, lambda i, _nd=nd: (0,) * _nd))

    return pl.pallas_call(
        functools.partial(_phi_kernel, add_skip),
        grid=(R // row_tile,),
        in_specs=in_specs,
        out_specs=[pl.BlockSpec((row_tile, H), lambda i: (i, 0)),
                   pl.BlockSpec((row_tile, 1), lambda i: (i, 0))],
        out_shape=[jax.ShapeDtypeStruct((R, H), jnp.float32),
                   jax.ShapeDtypeStruct((R, 1), jnp.float32)],
        compiler_params=pltpu.CompilerParams(
            dimension_semantics=("parallel",),
            vmem_limit_bytes=vmem_limit,
        ),
    )(u_pad, *params)


# ---------------------------------------------------------------------------
# Phase 2: pairwise Gaussian kernel, all scalars pre-folded into the inputs
# ---------------------------------------------------------------------------
def _pairwise_kernel(px_ref, pz_ref, cnx_ref, cnz_ref, out_ref):
    # (TM, H) x (TN, H)^T -> (TM, TN) on the MXU.
    g = lax.dot_general(px_ref[...], pz_ref[...], (((1,), (1,)), ((), ())),
                        preferred_element_type=jnp.float32)
    e = cnx_ref[...] + cnz_ref[...] + g        # == coeff * ||phi_x - phi_z||^2
    out_ref[...] = jnp.exp(jnp.minimum(e, 0.0)).astype(out_ref.dtype)


def kernel_approx_bp_forward(x, z, w1, b1, w2, b2, w3, b3, wskip, log_sigma,
                             *, add_skip=True, out_dtype=jnp.float32):
    """kxz = exp(-||phi(x)_i - phi(z)_j||^2 / (2 * 10**log_sigma))."""
    Nx, D = x.shape
    Nz = z.shape[0]
    H = w1.shape[0]

    vmem_limit = _vmem_limit_bytes()

    # Balanced pairwise tiles: padding stays far below one tile; TN lane-dense.
    nx_tiles = max(1, _cdiv(Nx, _TM_CAP))
    nz_tiles = max(1, _cdiv(Nz, _TN_CAP))
    if nx_tiles == 1 and nz_tiles == 1 and Nx >= 512:
        # Keep >=2 grid steps along a "parallel" axis so v7x's 2nd TensorCore works.
        nx_tiles = 2
    TM = _round_up(_cdiv(Nx, nx_tiles), 8)
    TN = _round_up(_cdiv(Nz, nz_tiles), 128)
    Nxp, Nzp = nx_tiles * TM, nz_tiles * TN

    x_pad = jnp.pad(x.astype(jnp.float32), ((0, Nxp - Nx), (0, 0)))
    z_pad = jnp.pad(z.astype(jnp.float32), ((0, Nzp - Nz), (0, 0)))

    # coeff = -1 / (2 * 10**log_sigma).  Fold sqrt(-2*coeff) = 10^(-log_sigma/2)
    # into the final-layer weights so the pairwise body needs no scalar multiplies.
    log_sigma = jnp.asarray(log_sigma, jnp.float32)
    s = jnp.power(10.0, -0.5 * log_sigma)

    params = [w1.T, b1[None, :], w2.T, b2[None, :], s * w3.T, s * b3[None, :]]
    if add_skip:
        params.append(s * wskip.T)
    params = [p.astype(jnp.float32) for p in params]

    # TODO(synk): the torch module's save_grad / grads_backward bookkeeping (custom
    # approximate backprop) has no forward-pass equivalent and is not translated.
    phi_x, cnx = _phi_forward(x_pad, params, add_skip, TM, vmem_limit)  # (Nxp,H),(Nxp,1)
    phi_z, cnz = _phi_forward(z_pad, params, add_skip, TN, vmem_limit)  # (Nzp,H),(Nzp,1)
    cnz_row = cnz.reshape(1, Nzp)  # row-major relabel, negligible cost

    kxz_pad = pl.pallas_call(
        _pairwise_kernel,
        grid=(nx_tiles, nz_tiles),
        in_specs=[
            pl.BlockSpec((TM, H), lambda i, j: (i, 0)),   # phi_scaled(x) tile
            pl.BlockSpec((TN, H), lambda i, j: (j, 0)),   # phi_scaled(z) tile
            pl.BlockSpec((TM, 1), lambda i, j: (i, 0)),   # coeff * ||phi(x)||^2
            pl.BlockSpec((1, TN), lambda i, j: (0, j)),   # coeff * ||phi(z)||^2 (lane axis)
        ],
        out_specs=pl.BlockSpec((TM, TN), lambda i, j: (i, j)),
        out_shape=jax.ShapeDtypeStruct((Nxp, Nzp), out_dtype),
        compiler_params=pltpu.CompilerParams(
            dimension_semantics=("parallel", "parallel"),
            vmem_limit_bytes=vmem_limit,
        ),
    )(phi_x, phi_z, cnx, cnz_row)

    if Nxp == Nx and Nzp == Nz:
        return kxz_pad          # no padding -> no post-kernel slice copy
    return kxz_pad[:Nx, :Nz]


# ---------------------------------------------------------------------------
# Pure-JAX reference (mirrors the torch broadcasting semantics exactly)
# ---------------------------------------------------------------------------
def _reference(x, z, w1, b1, w2, b2, w3, b3, wskip, log_sigma, *, add_skip=True):
    def mlp(u):
        h = _softplus(u @ w1.T + b1)
        h = _softplus(h @ w2.T + b2)
        out = h @ w3.T + b3
        if add_skip:
            out = out + u @ wskip.T
        return out

    phi_x, phi_z = mlp(x), mlp(z)
    diff = phi_x[:, None, :] - phi_z[None, :, :]
    diffsq = (diff ** 2).sum(2)
    return jnp.exp(-1.0 / (2.0 * 10.0 ** log_sigma) * diffsq)


if __name__ == "__main__":
    key = jax.random.PRNGKey(0)
    Nx, Nz, D, H = 8, 8, 16, 32
    add_skip = True
    sigma_init = 1.0  # log_sigma parameter init, as in the torch module

    keys = jax.random.split(key, 10)
    x = jax.random.normal(keys[0], (Nx, D), jnp.float32)
    z = jax.random.normal(keys[1], (Nz, D), jnp.float32)

    # Deterministic init mirroring init_weights: randn(out,in)/sqrt(out), bias randn(out)/sqrt(out)
    def init_linear(kw, kb, in_d, out_d, bias=True):
        w = (jax.random.normal(kw, (out_d, in_d)) / jnp.sqrt(float(out_d))).astype(jnp.float32)
        b = None
        if bias:
            b = (jax.random.normal(kb, (out_d,)) / jnp.sqrt(float(out_d))).astype(jnp.float32)
        return w, b

    w1, b1 = init_linear(keys[2], keys[3], D, H)
    w2, b2 = init_linear(keys[4], keys[5], H, H)
    w3, b3 = init_linear(keys[6], keys[7], H, H)
    wskip, _ = init_linear(keys[8], keys[9], D, H, bias=False)

    kxz = kernel_approx_bp_forward(x, z, w1, b1, w2, b2, w3, b3, wskip,
                                   sigma_init, add_skip=add_skip)
    kxz = jax.block_until_ready(kxz)

    ref = _reference(x, z, w1, b1, w2, b2, w3, b3, wskip, sigma_init,
                     add_skip=add_skip)
    assert kxz.shape == (Nx, Nz)
    assert jnp.allclose(kxz, ref, rtol=1e-4, atol=2e-5), "mismatch vs reference"
    print("KERNEL_OK")
</pallas_src>

<mosaic_0001>
module attributes {stable_mosaic.version = 11 : i64} {
  func.func @_phi_kernel(%arg0: i32, %arg1: memref<8x16xf32, #tpu.memory_space<vmem>>, %arg2: memref<16x32xf32, #tpu.memory_space<vmem>>, %arg3: memref<1x32xf32, #tpu.memory_space<vmem>>, %arg4: memref<32x32xf32, #tpu.memory_space<vmem>>, %arg5: memref<1x32xf32, #tpu.memory_space<vmem>>, %arg6: memref<32x32xf32, #tpu.memory_space<vmem>>, %arg7: memref<1x32xf32, #tpu.memory_space<vmem>>, %arg8: memref<16x32xf32, #tpu.memory_space<vmem>>, %arg9: memref<8x32xf32, #tpu.memory_space<vmem>>, %arg10: memref<8x1xf32, #tpu.memory_space<vmem>>) attributes {dimension_semantics = [#tpu.dimension_semantics<parallel>], iteration_bounds = array<i64: 1>, scalar_prefetch = 0 : i64, scratch_operands = 0 : i64, tpu.core_type = #tpu.core_type<tc>, window_params = [{transform_indices = @transform_0, window_bounds = array<i64: 8, 16>}, {pipeline_mode = #tpu.pipeline_mode<synchronous>, transform_indices = @transform_1, window_bounds = array<i64: 16, 32>}, {pipeline_mode = #tpu.pipeline_mode<synchronous>, transform_indices = @transform_2, window_bounds = array<i64: 1, 32>}, {pipeline_mode = #tpu.pipeline_mode<synchronous>, transform_indices = @transform_3, window_bounds = array<i64: 32, 32>}, {pipeline_mode = #tpu.pipeline_mode<synchronous>, transform_indices = @transform_4, window_bounds = array<i64: 1, 32>}, {pipeline_mode = #tpu.pipeline_mode<synchronous>, transform_indices = @transform_5, window_bounds = array<i64: 32, 32>}, {pipeline_mode = #tpu.pipeline_mode<synchronous>, transform_indices = @transform_6, window_bounds = array<i64: 1, 32>}, {pipeline_mode = #tpu.pipeline_mode<synchronous>, transform_indices = @transform_7, window_bounds = array<i64: 16, 32>}, {transform_indices = @transform_8, window_bounds = array<i64: 8, 32>}, {transform_indices = @transform_9, window_bounds = array<i64: 8, 1>}]} {
    %c0 = arith.constant 0 : index
    %c0_0 = arith.constant 0 : index
    %0 = vector.load %arg1[%c0, %c0_0] : memref<8x16xf32, #tpu.memory_space<vmem>>, vector<8x16xf32>
    %c0_1 = arith.constant 0 : index
    %c0_2 = arith.constant 0 : index
    %1 = vector.load %arg2[%c0_1, %c0_2] : memref<16x32xf32, #tpu.memory_space<vmem>>, vector<16x32xf32>
    %cst = arith.constant dense<0.000000e+00> : vector<8x32xf32>
    %2 = tpu.matmul %0, %1, %cst {dimension_numbers = #tpu.dot_dimension_numbers<[1], [0], [0], [1], [0, 0, 1, 1], [], []>} : vector<8x16xf32>, vector<16x32xf32>, vector<8x32xf32> -> vector<8x32xf32>
    %c0_3 = arith.constant 0 : index
    %c0_4 = arith.constant 0 : index
    %3 = vector.load %arg3[%c0_3, %c0_4] : memref<1x32xf32, #tpu.memory_space<vmem>>, vector<1x32xf32>
    %4 = vector.broadcast %3 : vector<1x32xf32> to vector<8x32xf32>
    %5 = arith.addf %2, %4 : vector<8x32xf32>
    %cst_5 = arith.constant 0.000000e+00 : f32
    %6 = vector.broadcast %cst_5 : f32 to vector<8x32xf32>
    %7 = arith.maximumf %5, %6 : vector<8x32xf32>
    %8 = math.absf %5 : vector<8x32xf32>
    %cst_6 = arith.constant 0.000000e+00 : f32
    %9 = vector.broadcast %cst_6 : f32 to vector<8x32xf32>
    %10 = arith.subf %9, %8 : vector<8x32xf32>
    %11 = math.exp %10 : vector<8x32xf32>
    %12 = math.log1p %11 : vector<8x32xf32>
    %13 = arith.addf %7, %12 : vector<8x32xf32>
    %c0_7 = arith.constant 0 : index
    %c0_8 = arith.constant 0 : index
    %14 = vector.load %arg4[%c0_7, %c0_8] : memref<32x32xf32, #tpu.memory_space<vmem>>, vector<32x32xf32>
    %cst_9 = arith.constant dense<0.000000e+00> : vector<8x32xf32>
    %15 = tpu.matmul %13, %14, %cst_9 {dimension_numbers = #tpu.dot_dimension_numbers<[1], [0], [0], [1], [0, 0, 1, 1], [], []>} : vector<8x32xf32>, vector<32x32xf32>, vector<8x32xf32> -> vector<8x32xf32>
    %c0_10 = arith.constant 0 : index
    %c0_11 = arith.constant 0 : index
    %16 = vector.load %arg5[%c0_10, %c0_11] : memref<1x32xf32, #tpu.memory_space<vmem>>, vector<1x32xf32>
    %17 = vector.broadcast %16 : vector<1x32xf32> to vector<8x32xf32>
    %18 = arith.addf %15, %17 : vector<8x32xf32>
    %cst_12 = arith.constant 0.000000e+00 : f32
    %19 = vector.broadcast %cst_12 : f32 to vector<8x32xf32>
    %20 = arith.maximumf %18, %19 : vector<8x32xf32>
    %21 = math.absf %18 : vector<8x32xf32>
    %cst_13 = arith.constant 0.000000e+00 : f32
    %22 = vector.broadcast %cst_13 : f32 to vector<8x32xf32>
    %23 = arith.subf %22, %21 : vector<8x32xf32>
    %24 = math.exp %23 : vector<8x32xf32>
    %25 = math.log1p %24 : vector<8x32xf32>
    %26 = arith.addf %20, %25 : vector<8x32xf32>
    %c0_14 = arith.constant 0 : index
    %c0_15 = arith.constant 0 : index
    %27 = vector.load %arg6[%c0_14, %c0_15] : memref<32x32xf32, #tpu.memory_space<vmem>>, vector<32x32xf32>
    %cst_16 = arith.constant dense<0.000000e+00> : vector<8x32xf32>
    %28 = tpu.matmul %26, %27, %cst_16 {dimension_numbers = #tpu.dot_dimension_numbers<[1], [0], [0], [1], [0, 0, 1, 1], [], []>} : vector<8x32xf32>, vector<32x32xf32>, vector<8x32xf32> -> vector<8x32xf32>
    %c0_17 = arith.constant 0 : index
    %c0_18 = arith.constant 0 : index
    %29 = vector.load %arg7[%c0_17, %c0_18] : memref<1x32xf32, #tpu.memory_space<vmem>>, vector<1x32xf32>
    %30 = vector.broadcast %29 : vector<1x32xf32> to vector<8x32xf32>
    %31 = arith.addf %28, %30 : vector<8x32xf32>
    %c0_19 = arith.constant 0 : index
    %c0_20 = arith.constant 0 : index
    %32 = vector.load %arg8[%c0_19, %c0_20] : memref<16x32xf32, #tpu.memory_space<vmem>>, vector<16x32xf32>
    %cst_21 = arith.constant dense<0.000000e+00> : vector<8x32xf32>
    %33 = tpu.matmul %0, %32, %cst_21 {dimension_numbers = #tpu.dot_dimension_numbers<[1], [0], [0], [1], [0, 0, 1, 1], [], []>} : vector<8x16xf32>, vector<16x32xf32>, vector<8x32xf32> -> vector<8x32xf32>
    %34 = arith.addf %31, %33 : vector<8x32xf32>
    %c0_22 = arith.constant 0 : index
    %c0_23 = arith.constant 0 : index
    %35 = vector.load %arg9[%c0_22, %c0_23] : memref<8x32xf32, #tpu.memory_space<vmem>>, vector<8x32xf32>
    tpu.vector_store %arg9[%c0_22, %c0_23], %34 {strides = array<i32>} : memref<8x32xf32, #tpu.memory_space<vmem>>, vector<8x32xf32>,
    %36 = arith.mulf %34, %34 : vector<8x32xf32>
    %cst_24 = arith.constant dense<0.000000e+00> : vector<8xf32>
    %37 = vector.multi_reduction <add>, %36, %cst_24 [1] : vector<8x32xf32> to vector<8xf32>
    %38 = vector.shape_cast %37 : vector<8xf32> to vector<8x1xf32>
    %cst_25 = arith.constant -5.000000e-01 : f32
    %39 = vector.broadcast %cst_25 : f32 to vector<8x1xf32>
    %40 = arith.mulf %39, %38 : vector<8x1xf32>
    %c0_26 = arith.constant 0 : index
    %c0_27 = arith.constant 0 : index
    %41 = vector.load %arg10[%c0_26, %c0_27] : memref<8x1xf32, #tpu.memory_space<vmem>>, vector<8x1xf32>
    tpu.vector_store %arg10[%c0_26, %c0_27], %40 {strides = array<i32>} : memref<8x1xf32, #tpu.memory_space<vmem>>, vector<8x1xf32>,
    return
  }
  func.func @transform_0(%arg0: i32) -> (i32, i32) {
    %c0_i32 = arith.constant 0 : i32
    %c0_i32_0 = arith.constant 0 : i32
    return %arg0, %c0_i32 : i32, i32
  }
  func.func @transform_1(%arg0: i32) -> (i32, i32) {
    %c0_i32 = arith.constant 0 : i32
    %c0_i32_0 = arith.constant 0 : i32
    %c0_i32_1 = arith.constant 0 : i32
    return %c0_i32, %c0_i32_0 : i32, i32
  }
  func.func @transform_2(%arg0: i32) -> (i32, i32) {
    %c0_i32 = arith.constant 0 : i32
    %c0_i32_0 = arith.constant 0 : i32
    %c0_i32_1 = arith.constant 0 : i32
    return %c0_i32, %c0_i32_0 : i32, i32
  }
  func.func @transform_3(%arg0: i32) -> (i32, i32) {
    %c0_i32 = arith.constant 0 : i32
    %c0_i32_0 = arith.constant 0 : i32
    %c0_i32_1 = arith.constant 0 : i32
    return %c0_i32, %c0_i32_0 : i32, i32
  }
  func.func @transform_4(%arg0: i32) -> (i32, i32) {
    %c0_i32 = arith.constant 0 : i32
    %c0_i32_0 = arith.constant 0 : i32
    %c0_i32_1 = arith.constant 0 : i32
    return %c0_i32, %c0_i32_0 : i32, i32
  }
  func.func @transform_5(%arg0: i32) -> (i32, i32) {
    %c0_i32 = arith.constant 0 : i32
    %c0_i32_0 = arith.constant 0 : i32
    %c0_i32_1 = arith.constant 0 : i32
    return %c0_i32, %c0_i32_0 : i32, i32
  }
  func.func @transform_6(%arg0: i32) -> (i32, i32) {
    %c0_i32 = arith.constant 0 : i32
    %c0_i32_0 = arith.constant 0 : i32
    %c0_i32_1 = arith.constant 0 : i32
    return %c0_i32, %c0_i32_0 : i32, i32
  }
  func.func @transform_7(%arg0: i32) -> (i32, i32) {
    %c0_i32 = arith.constant 0 : i32
    %c0_i32_0 = arith.constant 0 : i32
    %c0_i32_1 = arith.constant 0 : i32
    return %c0_i32, %c0_i32_0 : i32, i32
  }
  func.func @transform_8(%arg0: i32) -> (i32, i32) {
    %c0_i32 = arith.constant 0 : i32
    %c0_i32_0 = arith.constant 0 : i32
    return %arg0, %c0_i32 : i32, i32
  }
  func.func @transform_9(%arg0: i32) -> (i32, i32) {
    %c0_i32 = arith.constant 0 : i32
    %c0_i32_0 = arith.constant 0 : i32
    return %arg0, %c0_i32 : i32, i32
  }
}

</mosaic_0001>

<llo_original>
// kernel: tpu_custom_call.1
$region0: #{tpu_custom_call.1}
  #allocation0 [shape = 'u32[]', space=smem, size = 0x4, offset = 0x4, fixed_abs, tag = 'smem constant byte address 0x4 - core index']
  #allocation1 [shape = 'u32[144,128]{1,0:T(1,128)}', space=vmem, size = 0x12000, scoped, tag = 'internal scratch']
  %s0 = inlined_call_operand.hbm [shape: f32[8,16], index: 0, kind: input, shape index: {}]
  %s1 = inlined_call_operand.hbm [shape: f32[16,32], index: 1, kind: input, shape index: {}]
  %s2 = inlined_call_operand.vmem [shape: f32[1,32], index: 2, kind: input, shape index: {}]
  %s3 = inlined_call_operand.hbm [shape: f32[32,32], index: 3, kind: input, shape index: {}]
  %s4 = inlined_call_operand.vmem [shape: f32[1,32], index: 4, kind: input, shape index: {}]
  %s5 = inlined_call_operand.hbm [shape: f32[32,32], index: 5, kind: input, shape index: {}]
  %s6 = inlined_call_operand.vmem [shape: f32[1,32], index: 6, kind: input, shape index: {}]
  %s7 = inlined_call_operand.vmem [shape: f32[16,32], index: 7, kind: input, shape index: {}]
  %s8 = inlined_call_operand.hbm [shape: f32[8,32], index: 8, kind: output, shape index: {0}]
  %s9 = inlined_call_operand.vmem [shape: f32[8,1], index: 9, kind: output, shape index: {1}]
  %10 = xla_tuple %s8, %s9
  %s11 = sld [smem:[#allocation0]]
  $region66: #{tpu_custom_call.1} parent=0
    _
  %s13 = ssub.s32 1, %s11
  %s14 = scalar_select 0, %s13, %s11
  $region1: #{tpu_custom_call.1} parent=0
    #allocation2 [shape = 'u8[4096]{0}', space=vmem, size = 0x1000, scoped, tag = 'input window, operand 0, single buffered']
    #allocation3 [shape = 's32[1]{0}', space=sflag, size = 0x4, scoped, tag = 'scoped memory for tpu_custom_call.1']
    #allocation4 [shape = 's32[1]{0}', space=sflag, size = 0x4, scoped, tag = 'scoped memory for tpu_custom_call.1']
    #allocation5 [shape = 'u8[8192]{0}', space=vmem, size = 0x2000, scoped, tag = 'input window, operand 1, single buffered']
    #allocation6 [shape = 's32[1]{0}', space=sflag, size = 0x4, scoped, tag = 'scoped memory for tpu_custom_call.1']
    #allocation7 [shape = 'u8[16384]{0}', space=vmem, size = 0x4000, scoped, tag = 'input window, operand 3, single buffered']
    #allocation8 [shape = 'u8[16384]{0}', space=vmem, size = 0x4000, scoped, tag = 'input window, operand 5, single buffered']
    #allocation9 [shape = 's32[1]{0}', space=sflag, size = 0x4, scoped, tag = 'scoped memory for tpu_custom_call.1']
    #allocation10 [shape = 'u8[4096]{0}', space=vmem, size = 0x1000, scoped, tag = 'output window, operand 0, single buffered']
    %15 = vsyncpa [#allocation3], 0
    %16 = vsyncpa [#allocation6], 0
    %17 = vsyncpa [#allocation9], 0
    %18 = vsyncpa [#allocation4], 0
    // Predicated region
    $region2: #{tpu_custom_call.1} parent=1 // pred_check
      _
    $region3: #{tpu_custom_call.1} parent=1 // pred_check_branch
      %20 = sbr.rel (0) target = $region5
    $region4: #{tpu_custom_call.1} parent=1 // pred_region
      %s22 = ssub.s32 128, 128
      %23 = vsyncadd [#allocation3], %s22
      %s25 = sshll.u32 [#allocation2], 4
      %s26 = int_to_ptr.vmem [resolvable:$true] %s25
      %28 = dma.hbm_to_vmem [thread:$0]  %s0, 128, %s26, [#allocation3]
    $region5: #{tpu_custom_call.1} parent=1 // pred_fallthru
      _
    // Predicated region
    $region6: #{tpu_custom_call.1} parent=1 // pred_check
      _
    $region7: #{tpu_custom_call.1} parent=1 // pred_check_branch
      %30 = sbr.rel (0) target = $region9
    $region8: #{tpu_custom_call.1} parent=1 // pred_region
      %s32 = ssub.s32 256, 256
      %33 = vsyncadd [#allocation6], %s32
      %s34 = sshll.u32 [#allocation5], 4
      %s35 = int_to_ptr.vmem [resolvable:$true] %s34
      %40 = dma.hbm_to_vmem [thread:$0]  %s1, 256, %s35, [#allocation6], 128, 128, 8
    $region9: #{tpu_custom_call.1} parent=1 // pred_fallthru
      _
    // Predicated region
    $region10: #{tpu_custom_call.1} parent=1 // pred_check
      _
    $region11: #{tpu_custom_call.1} parent=1 // pred_check_branch
      %42 = sbr.rel (0) target = $region13
    $region12: #{tpu_custom_call.1} parent=1 // pred_region
      _
    $region13: #{tpu_custom_call.1} parent=1 // pred_fallthru
      _
    // Predicated region
    $region14: #{tpu_custom_call.1} parent=1 // pred_check
      _
    $region15: #{tpu_custom_call.1} parent=1 // pred_check_branch
      %44 = sbr.rel (0) target = $region17
    $region16: #{tpu_custom_call.1} parent=1 // pred_region
      %s46 = ssub.s32 512, 512
      %47 = vsyncadd [#allocation6], %s46
      %s48 = sshll.u32 [#allocation7], 4
      %s49 = int_to_ptr.vmem [resolvable:$true] %s48
      %54 = dma.hbm_to_vmem [thread:$0]  %s3, 512, %s49, [#allocation6], 128, 128, 8
    $region17: #{tpu_custom_call.1} parent=1 // pred_fallthru
      _
    // Predicated region
    $region18: #{tpu_custom_call.1} parent=1 // pred_check
      _
    $region19: #{tpu_custom_call.1} parent=1 // pred_check_branch
      %56 = sbr.rel (0) target = $region21
    $region20: #{tpu_custom_call.1} parent=1 // pred_region
      _
    $region21: #{tpu_custom_call.1} parent=1 // pred_fallthru
      _
    // Predicated region
    $region22: #{tpu_custom_call.1} parent=1 // pred_check
      _
    $region23: #{tpu_custom_call.1} parent=1 // pred_check_branch
      %58 = sbr.rel (0) target = $region25
    $region24: #{tpu_custom_call.1} parent=1 // pred_region
      %s60 = ssub.s32 512, 512
      %61 = vsyncadd [#allocation9], %s60
      %s62 = sshll.u32 [#allocation8], 4
      %s63 = int_to_ptr.vmem [resolvable:$true] %s62
      %68 = dma.hbm_to_vmem [thread:$0]  %s5, 512, %s63, [#allocation9], 128, 128, 8
    $region25: #{tpu_custom_call.1} parent=1 // pred_fallthru
      _
    // Predicated region
    $region26: #{tpu_custom_call.1} parent=1 // pred_check
      _
    $region27: #{tpu_custom_call.1} parent=1 // pred_check_branch
      %70 = sbr.rel (0) target = $region29
    $region28: #{tpu_custom_call.1} parent=1 // pred_region
      _
    $region29: #{tpu_custom_call.1} parent=1 // pred_fallthru
      _
    // Predicated region
    $region30: #{tpu_custom_call.1} parent=1 // pred_check
      _
    $region31: #{tpu_custom_call.1} parent=1 // pred_check_branch
      %72 = sbr.rel (0) target = $region33
    $region32: #{tpu_custom_call.1} parent=1 // pred_region
      _
    $region33: #{tpu_custom_call.1} parent=1 // pred_fallthru
      _
    // Predicated region
    $region34: #{tpu_custom_call.1} parent=1 // pred_check
      _
    $region35: #{tpu_custom_call.1} parent=1 // pred_check_branch
      %74 = sbr.rel (0) target = $region37
    $region36: #{tpu_custom_call.1} parent=1 // pred_region
      %75 = dma.done [#allocation3], 128
    $region37: #{tpu_custom_call.1} parent=1 // pred_fallthru
      _
    // Predicated region
    $region38: #{tpu_custom_call.1} parent=1 // pred_check
      _
    $region39: #{tpu_custom_call.1} parent=1 // pred_check_branch
      %77 = sbr.rel (0) target = $region41
    $region40: #{tpu_custom_call.1} parent=1 // pred_region
      %78 = dma.done [#allocation6], 256
    $region41: #{tpu_custom_call.1} parent=1 // pred_fallthru
      _
    // Predicated region
    $region42: #{tpu_custom_call.1} parent=1 // pred_check
      _
    $region43: #{tpu_custom_call.1} parent=1 // pred_check_branch
      %80 = sbr.rel (0) target = $region45
    $region44: #{tpu_custom_call.1} parent=1 // pred_region
      %81 = dma.done [#allocation6], 512
    $region45: #{tpu_custom_call.1} parent=1 // pred_fallthru
      _
    // Predicated region
    $region46: #{tpu_custom_call.1} parent=1 // pred_check
      _
    $region47: #{tpu_custom_call.1} parent=1 // pred_check_branch
      %83 = sbr.rel (0) target = $region49
    $region48: #{tpu_custom_call.1} parent=1 // pred_region
      %84 = dma.done [#allocation9], 512
    $region49: #{tpu_custom_call.1} parent=1 // pred_fallthru
      _
    %v85 = vld [vmem:[#allocation2] sm:$0xff]
    %v86 = vld [vmem:[#allocation5] sm:$0xff]
    %v87 = vld [vmem:[#allocation5 + $0x8] sm:$0xff]
    %v88 = vld [vmem:[%s2] sm:$0x1]
    %v90 = vlaneseq
    %v91 = vshrl.u32 %v90, 7
    %v92 = vsub.s32 0, %v91
    %v93 = vrot.slane %v88, %v92
    %vm95 = vcmask 130048
    %v97 = vsel %vm95, %v85, 0
    %99 = vmatprep.subr.mxu0 0.0
    %100 = vmatpush1.msra.mxu0 %v86
    %101 = vmatprep.subr.mxu0 0.0
    %102 = vmatpush1.msra.mxu0 %v87
    %103 = vmatprep.subr.mxu0 0.0
    %104 = vmatpush1.msra.mxu0 0.0
    %105 = vmatprep.subr.mxu0 0.0
    %106 = vmatpush1.msra.mxu0 0.0
    %107 = vmatprep.subr.mxu0 0.0
    %108 = vmatpush1.msra.mxu0 0.0
    %109 = vmatprep.subr.mxu0 0.0
    %110 = vmatpush1.msra.mxu0 0.0
    %111 = vmatprep.subr.mxu0 0.0
    %112 = vmatpush1.msra.mxu0 0.0
    %113 = vmatprep.subr.mxu0 0.0
    %114 = vmatpush1.msra.mxu0 0.0
    %115 = vmatprep.subr.mxu0 0.0
    %116 = vmatpush1.msra.mxu0 0.0
    %117 = vmatprep.subr.mxu0 0.0
    %118 = vmatpush1.msra.mxu0 0.0
    %119 = vmatprep.subr.mxu0 0.0
    %120 = vmatpush1.msra.mxu0 0.0
    %121 = vmatprep.subr.mxu0 0.0
    %122 = vmatpush1.msra.mxu0 0.0
    %123 = vmatprep.subr.mxu0 0.0
    %124 = vmatpush1.msra.mxu0 0.0
    %125 = vmatprep.subr.mxu0 0.0
    %126 = vmatpush1.msra.mxu0 0.0
    %127 = vmatprep.subr.mxu0 0.0
    %128 = vmatpush1.msra.mxu0 0.0
    %129 = vmatprep.subr.mxu0 0.0
    %130 = vmatpush1.msra.mxu0 0.0
    %131 = vmatprep.subr.mxu0 0.0
    %132 = vmatpush1.msra.mxu0 0.0
    %133 = vmatprep.subr.mxu0 0.0
    %134 = vmatpush1.msra.mxu0 0.0
    %135 = vmatprep.subr.mxu0 0.0
    %136 = vmatpush1.msra.mxu0 0.0
    %137 = vmatprep.subr.mxu0 0.0
    %138 = vmatpush1.msra.mxu0 0.0
    %139 = vmatprep.subr.mxu0 0.0
    %140 = vmatpush1.msra.mxu0 0.0
    %141 = vmatprep.subr.mxu0 0.0
    %142 = vmatpush1.msra.mxu0 0.0
    %143 = vmatprep.subr.mxu0 0.0
    %144 = vmatpush1.msra.mxu0 0.0
    %145 = vmatprep.subr.mxu0 0.0
    %146 = vmatpush1.msra.mxu0 0.0
    %147 = vmatprep.subr.mxu0 0.0
    %148 = vmatpush1.msra.mxu0 0.0
    %149 = vmatprep.subr.mxu0 0.0
    %150 = vmatpush1.msra.mxu0 0.0
    %151 = vmatprep.subr.mxu0 0.0
    %152 = vmatpush1.msra.mxu0 0.0
    %153 = vmatprep.subr.mxu0 0.0
    %154 = vmatpush1.msra.mxu0 0.0
    %155 = vmatprep.subr.mxu0 0.0
    %156 = vmatpush1.msra.mxu0 0.0
    %157 = vmatprep.subr.mxu0 0.0
    %158 = vmatpush1.msra.mxu0 0.0
    %159 = vmatprep.subr.mxu0 0.0
    %160 = vmatpush1.msra.mxu0 0.0
    %161 = vmatprep.subr.mxu0 0.0
    %162 = vmatpush1.msra.mxu0 0.0
    %163 = vmatprep.mubr.f32.mxu0 0.0
    %164 = vmatmul.mubr.f32.gmra.mrb[0].mxu0 %v97
    %v165 = vpop.f32.mrb[0].mxu0
    %v166 = vadd.f32 %v93, %v165
    %v167 = vpop.f32.mrb[0].mxu0
    %168 = vdwg.mxu0
    %v169 = vmax.f32 %v166, 0.0
    %v170 = vand.u32 2147483647, %v166
    %v171 = vsub.f32 0.0, %v170
    %v172 = vmul.f32 %v171, 1.442695
    %v173 = vpow.pop %v172
    %v174 = vadd.f32 %v173, 1.0
    %v175 = vlog2.pop %v174
    %v176 = vmul.f32 %v175, 0.6931472
    %v177 = vmul.f32 -0.5, %v173
    %v178 = vadd.f32 %v177, 1.0
    %v179 = vmul.f32 %v178, %v173
    %v180 = vand.u32 2147483647, %v173
    %vm181 = vcmp.lt.f32.partialorder %v180, 0.0004427343
    %v182 = vsel %vm181, %v179, %v176
    %v183 = vadd.f32 %v169, %v182
    %v184 = vld [vmem:[#allocation7] sm:$0xff]
    %v185 = vld [vmem:[#allocation7 + $0x8] sm:$0xff]
    %v186 = vld [vmem:[#allocation7 + $0x10] sm:$0xff]
    %v187 = vld [vmem:[#allocation7 + $0x18] sm:$0xff]
    %v188 = vld [vmem:[%s4] sm:$0x1]
    %v190 = vlaneseq
    %v191 = vshrl.u32 %v190, 7
    %v192 = vsub.s32 0, %v191
    %v193 = vrot.slane %v188, %v192
    %vm195 = vcmask 261120
    %v197 = vsel %vm195, %v183, 0
    %199 = vmatprep.subr.mxu0 0.0
    %200 = vmatpush1.msra.mxu0 %v184
    %201 = vmatprep.subr.mxu0 0.0
    %202 = vmatpush1.msra.mxu0 %v185
    %203 = vmatprep.subr.mxu0 0.0
    %204 = vmatpush1.msra.mxu0 %v186
    %205 = vmatprep.subr.mxu0 0.0
    %206 = vmatpush1.msra.mxu0 %v187
    %207 = vmatprep.subr.mxu0 0.0
    %208 = vmatpush1.msra.mxu0 0.0
    %209 = vmatprep.subr.mxu0 0.0
    %210 = vmatpush1.msra.mxu0 0.0
    %211 = vmatprep.subr.mxu0 0.0
    %212 = vmatpush1.msra.mxu0 0.0
    %213 = vmatprep.subr.mxu0 0.0
    %214 = vmatpush1.msra.mxu0 0.0
    %215 = vmatprep.subr.mxu0 0.0
    %216 = vmatpush1.msra.mxu0 0.0
    %217 = vmatprep.subr.mxu0 0.0
    %218 = vmatpush1.msra.mxu0 0.0
    %219 = vmatprep.subr.mxu0 0.0
    %220 = vmatpush1.msra.mxu0 0.0
    %221 = vmatprep.subr.mxu0 0.0
    %222 = vmatpush1.msra.mxu0 0.0
    %223 = vmatprep.subr.mxu0 0.0
    %224 = vmatpush1.msra.mxu0 0.0
    %225 = vmatprep.subr.mxu0 0.0
    %226 = vmatpush1.msra.mxu0 0.0
    %227 = vmatprep.subr.mxu0 0.0
    %228 = vmatpush1.msra.mxu0 0.0
    %229 = vmatprep.subr.mxu0 0.0
    %230 = vmatpush1.msra.mxu0 0.0
    %231 = vmatprep.subr.mxu0 0.0
    %232 = vmatpush1.msra.mxu0 0.0
    %233 = vmatprep.subr.mxu0 0.0
    %234 = vmatpush1.msra.mxu0 0.0
    %235 = vmatprep.subr.mxu0 0.0
    %236 = vmatpush1.msra.mxu0 0.0
    %237 = vmatprep.subr.mxu0 0.0
    %238 = vmatpush1.msra.mxu0 0.0
    %239 = vmatprep.subr.mxu0 0.0
    %240 = vmatpush1.msra.mxu0 0.0
    %241 = vmatprep.subr.mxu0 0.0
    %242 = vmatpush1.msra.mxu0 0.0
    %243 = vmatprep.subr.mxu0 0.0
    %244 = vmatpush1.msra.mxu0 0.0
    %245 = vmatprep.subr.mxu0 0.0
    %246 = vmatpush1.msra.mxu0 0.0
    %247 = vmatprep.subr.mxu0 0.0
    %248 = vmatpush1.msra.mxu0 0.0
    %249 = vmatprep.subr.mxu0 0.0
    %250 = vmatpush1.msra.mxu0 0.0
    %251 = vmatprep.subr.mxu0 0.0
    %252 = vmatpush1.msra.mxu0 0.0
    %253 = vmatprep.subr.mxu0 0.0
    %254 = vmatpush1.msra.mxu0 0.0
    %255 = vmatprep.subr.mxu0 0.0
    %256 = vmatpush1.msra.mxu0 0.0
    %257 = vmatprep.subr.mxu0 0.0
    %258 = vmatpush1.msra.mxu0 0.0
    %259 = vmatprep.subr.mxu0 0.0
    %260 = vmatpush1.msra.mxu0 0.0
    %261 = vmatprep.subr.mxu0 0.0
    %262 = vmatpush1.msra.mxu0 0.0
    %263 = vmatprep.mubr.f32.mxu0 0.0
    %264 = vmatmul.mubr.f32.gmra.mrb[0].mxu0 %v197
    %v265 = vpop.f32.mrb[0].mxu0
    %v266 = vadd.f32 %v193, %v265
    %v267 = vpop.f32.mrb[0].mxu0
    %268 = vdwg.mxu0
    %v269 = vmax.f32 %v266, 0.0
    %v270 = vand.u32 2147483647, %v266
    %v271 = vsub.f32 0.0, %v270
    %v272 = vmul.f32 %v271, 1.442695
    %v273 = vpow.pop %v272
    %v274 = vadd.f32 %v273, 1.0
    %v275 = vlog2.pop %v274
    %v276 = vmul.f32 %v275, 0.6931472
    %v277 = vmul.f32 -0.5, %v273
    %v278 = vadd.f32 %v277, 1.0
    %v279 = vmul.f32 %v278, %v273
    %v280 = vand.u32 2147483647, %v273
    %vm281 = vcmp.lt.f32.partialorder %v280, 0.0004427343
    %v282 = vsel %vm281, %v279, %v276
    %v283 = vadd.f32 %v269, %v282
    %v284 = vld [vmem:[#allocation8] sm:$0xff]
    %v285 = vld [vmem:[#allocation8 + $0x8] sm:$0xff]
    %v286 = vld [vmem:[#allocation8 + $0x10] sm:$0xff]
    %v287 = vld [vmem:[#allocation8 + $0x18] sm:$0xff]
    %v288 = vld [vmem:[%s6] sm:$0x1]
    %v290 = vlaneseq
    %v291 = vshrl.u32 %v290, 7
    %v292 = vsub.s32 0, %v291
    %v293 = vrot.slane %v288, %v292
    %v296 = vsel %vm195, %v283, 0
    %298 = vmatprep.subr.mxu0 0.0
    %299 = vmatpush1.msra.mxu0 %v284
    %300 = vmatprep.subr.mxu0 0.0
    %301 = vmatpush1.msra.mxu0 %v285
    %302 = vmatprep.subr.mxu0 0.0
    %303 = vmatpush1.msra.mxu0 %v286
    %304 = vmatprep.subr.mxu0 0.0
    %305 = vmatpush1.msra.mxu0 %v287
    %306 = vmatprep.subr.mxu0 0.0
    %307 = vmatpush1.msra.mxu0 0.0
    %308 = vmatprep.subr.mxu0 0.0
    %309 = vmatpush1.msra.mxu0 0.0
    %310 = vmatprep.subr.mxu0 0.0
    %311 = vmatpush1.msra.mxu0 0.0
    %312 = vmatprep.subr.mxu0 0.0
    %313 = vmatpush1.msra.mxu0 0.0
    %314 = vmatprep.subr.mxu0 0.0
    %315 = vmatpush1.msra.mxu0 0.0
    %316 = vmatprep.subr.mxu0 0.0
    %317 = vmatpush1.msra.mxu0 0.0
    %318 = vmatprep.subr.mxu0 0.0
    %319 = vmatpush1.msra.mxu0 0.0
    %320 = vmatprep.subr.mxu0 0.0
    %321 = vmatpush1.msra.mxu0 0.0
    %322 = vmatprep.subr.mxu0 0.0
    %323 = vmatpush1.msra.mxu0 0.0
    %324 = vmatprep.subr.mxu0 0.0
    %325 = vmatpush1.msra.mxu0 0.0
    %326 = vmatprep.subr.mxu0 0.0
    %327 = vmatpush1.msra.mxu0 0.0
    %328 = vmatprep.subr.mxu0 0.0
    %329 = vmatpush1.msra.mxu0 0.0
    %330 = vmatprep.subr.mxu0 0.0
    %331 = vmatpush1.msra.mxu0 0.0
    %332 = vmatprep.subr.mxu0 0.0
    %333 = vmatpush1.msra.mxu0 0.0
    %334 = vmatprep.subr.mxu0 0.0
    %335 = vmatpush1.msra.mxu0 0.0
    %336 = vmatprep.subr.mxu0 0.0
    %337 = vmatpush1.msra.mxu0 0.0
    %338 = vmatprep.subr.mxu0 0.0
    %339 = vmatpush1.msra.mxu0 0.0
    %340 = vmatprep.subr.mxu0 0.0
    %341 = vmatpush1.msra.mxu0 0.0
    %342 = vmatprep.subr.mxu0 0.0
    %343 = vmatpush1.msra.mxu0 0.0
    %344 = vmatprep.subr.mxu0 0.0
    %345 = vmatpush1.msra.mxu0 0.0
    %346 = vmatprep.subr.mxu0 0.0
    %347 = vmatpush1.msra.mxu0 0.0
    %348 = vmatprep.subr.mxu0 0.0
    %349 = vmatpush1.msra.mxu0 0.0
    %350 = vmatprep.subr.mxu0 0.0
    %351 = vmatpush1.msra.mxu0 0.0
    %352 = vmatprep.subr.mxu0 0.0
    %353 = vmatpush1.msra.mxu0 0.0
    %354 = vmatprep.subr.mxu0 0.0
    %355 = vmatpush1.msra.mxu0 0.0
    %356 = vmatprep.subr.mxu0 0.0
    %357 = vmatpush1.msra.mxu0 0.0
    %358 = vmatprep.subr.mxu0 0.0
    %359 = vmatpush1.msra.mxu0 0.0
    %360 = vmatprep.subr.mxu0 0.0
    %361 = vmatpush1.msra.mxu0 0.0
    %362 = vmatprep.mubr.f32.mxu0 0.0
    %363 = vmatmul.mubr.f32.gmra.mrb[0].mxu0 %v296
    %v364 = vpop.f32.mrb[0].mxu0
    %v365 = vadd.f32 %v293, %v364
    %v366 = vpop.f32.mrb[0].mxu0
    %367 = vdwg.mxu0
    %v368 = vld [vmem:[%s7] sm:$0xff]
    %v369 = vld [vmem:[%s7 + $0x8] sm:$0xff]
    %370 = vmatprep.subr.mxu0 0.0
    %371 = vmatpush1.msra.mxu0 %v368
    %372 = vmatprep.subr.mxu0 0.0
    %373 = vmatpush1.msra.mxu0 %v369
    %374 = vmatprep.subr.mxu0 0.0
    %375 = vmatpush1.msra.mxu0 0.0
    %376 = vmatprep.subr.mxu0 0.0
    %377 = vmatpush1.msra.mxu0 0.0
    %378 = vmatprep.subr.mxu0 0.0
    %379 = vmatpush1.msra.mxu0 0.0
    %380 = vmatprep.subr.mxu0 0.0
    %381 = vmatpush1.msra.mxu0 0.0
    %382 = vmatprep.subr.mxu0 0.0
    %383 = vmatpush1.msra.mxu0 0.0
    %384 = vmatprep.subr.mxu0 0.0
    %385 = vmatpush1.msra.mxu0 0.0
    %386 = vmatprep.subr.mxu0 0.0
    %387 = vmatpush1.msra.mxu0 0.0
    %388 = vmatprep.subr.mxu0 0.0
    %389 = vmatpush1.msra.mxu0 0.0
    %390 = vmatprep.subr.mxu0 0.0
    %391 = vmatpush1.msra.mxu0 0.0
    %392 = vmatprep.subr.mxu0 0.0
    %393 = vmatpush1.msra.mxu0 0.0
    %394 = vmatprep.subr.mxu0 0.0
    %395 = vmatpush1.msra.mxu0 0.0
    %396 = vmatprep.subr.mxu0 0.0
    %397 = vmatpush1.msra.mxu0 0.0
    %398 = vmatprep.subr.mxu0 0.0
    %399 = vmatpush1.msra.mxu0 0.0
    %400 = vmatprep.subr.mxu0 0.0
    %401 = vmatpush1.msra.mxu0 0.0
    %402 = vmatprep.subr.mxu0 0.0
    %403 = vmatpush1.msra.mxu0 0.0
    %404 = vmatprep.subr.mxu0 0.0
    %405 = vmatpush1.msra.mxu0 0.0
    %406 = vmatprep.subr.mxu0 0.0
    %407 = vmatpush1.msra.mxu0 0.0
    %408 = vmatprep.subr.mxu0 0.0
    %409 = vmatpush1.msra.mxu0 0.0
    %410 = vmatprep.subr.mxu0 0.0
    %411 = vmatpush1.msra.mxu0 0.0
    %412 = vmatprep.subr.mxu0 0.0
    %413 = vmatpush1.msra.mxu0 0.0
    %414 = vmatprep.subr.mxu0 0.0
    %415 = vmatpush1.msra.mxu0 0.0
    %416 = vmatprep.subr.mxu0 0.0
    %417 = vmatpush1.msra.mxu0 0.0
    %418 = vmatprep.subr.mxu0 0.0
    %419 = vmatpush1.msra.mxu0 0.0
    %420 = vmatprep.subr.mxu0 0.0
    %421 = vmatpush1.msra.mxu0 0.0
    %422 = vmatprep.subr.mxu0 0.0
    %423 = vmatpush1.msra.mxu0 0.0
    %424 = vmatprep.subr.mxu0 0.0
    %425 = vmatpush1.msra.mxu0 0.0
    %426 = vmatprep.subr.mxu0 0.0
    %427 = vmatpush1.msra.mxu0 0.0
    %428 = vmatprep.subr.mxu0 0.0
    %429 = vmatpush1.msra.mxu0 0.0
    %430 = vmatprep.subr.mxu0 0.0
    %431 = vmatpush1.msra.mxu0 0.0
    %432 = vmatprep.subr.mxu0 0.0
    %433 = vmatpush1.msra.mxu0 0.0
    %434 = vmatprep.mubr.f32.mxu0 0.0
    %435 = vmatmul.mubr.f32.gmra.mrb[0].mxu0 %v97
    %v436 = vpop.f32.mrb[0].mxu0
    %v437 = vadd.f32 0.0, %v436
    %v438 = vpop.f32.mrb[0].mxu0
    %439 = vdwg.mxu0
    %v440 = vadd.f32 %v365, %v437
    %441 = vst.msk [vmem:[#allocation10] sm:$0xff] %vm195, %v440
    %v442 = vmul.f32 %v440, %v440
    %v443 = vsel %vm195, %v442, 0.0
    %444 = vadd.xlane.f32.xlu0 %v443
    %v445 = vpop.xlane.xlu0 %444
    %v446 = vmul.f32 %v445, -0.5
    %vm447 = vcmask 7168
    %448 = vst.msk [vmem:[%s9] sm:$0xff] %vm447, %v446
    // Predicated region
    $region50: #{tpu_custom_call.1} parent=1 // pred_check
      _
    $region51: #{tpu_custom_call.1} parent=1 // pred_check_branch
      %450 = sbr.rel (0) target = $region53
    $region52: #{tpu_custom_call.1} parent=1 // pred_region
      %s452 = ssub.s32 128, 128
      %453 = vsyncadd [#allocation4], %s452
      %s455 = sshll.u32 [#allocation10], 4
      %s456 = int_to_ptr.vmem [resolvable:$true] %s455
      %458 = dma.vmem_to_hbm [thread:$0]  %s456, 128, %s8, [#allocation4]
    $region53: #{tpu_custom_call.1} parent=1 // pred_fallthru
      _
    // Predicated region
    $region54: #{tpu_custom_call.1} parent=1 // pred_check
      _
    $region55: #{tpu_custom_call.1} parent=1 // pred_check_branch
      %460 = sbr.rel (0) target = $region57
    $region56: #{tpu_custom_call.1} parent=1 // pred_region
      _
    $region57: #{tpu_custom_call.1} parent=1 // pred_fallthru
      _
    // Predicated region
    $region58: #{tpu_custom_call.1} parent=1 // pred_check
      _
    $region59: #{tpu_custom_call.1} parent=1 // pred_check_branch
      %462 = sbr.rel (0) target = $region61
    $region60: #{tpu_custom_call.1} parent=1 // pred_region
      %463 = dma.done [#allocation4], 128
    $region61: #{tpu_custom_call.1} parent=1 // pred_fallthru
      _
    // Predicated region
    $region62: #{tpu_custom_call.1} parent=1 // pred_check
      _
    $region63: #{tpu_custom_call.1} parent=1 // pred_check_branch
      %465 = sbr.rel (0) target = $region65
    $region64: #{tpu_custom_call.1} parent=1 // pred_region
      _
    $region65: #{tpu_custom_call.1} parent=1 // pred_fallthru
      _
    %466 = vsyncpa [#allocation3], 1
    %467 = vsyncpa [#allocation6], 1
    %468 = vsyncpa [#allocation9], 1
    %469 = vsyncpa [#allocation4], 1

</llo_original>
